<compile_context>
chip_gen: v7x
topology: tpu7x:2x2x1
jax: 0.10.0
libtpu: 0.0.40
codegen_flags: <defaults>
</compile_context>

<pallas_src>
import numpy as np
import jax
import jax.numpy as jnp
from jax.experimental import pallas as pl
from jax.experimental.pallas import tpu as pltpu

# ---- geometry fixed by fc1's 16*16*6 == 1536 flatten -------------------------------
KH = KW = 5
H_IN, W_IN = 60, 44                     # input spatial: (60-4)/2=28, (44-4)/2=20, ...
H1V, W1V = H_IN - 4, W_IN - 4           # conv1 valid out: 56 x 40
H1P, W1P = H1V // 2, W1V // 2           # pool1:           28 x 20
H2V, W2V = H1P - 4, W1P - 4             # conv2 valid out: 24 x 16
H2P, W2P = H2V // 2, W2V // 2           # pool2:           12 x 8
N_FEAT = 16 * H2P * W2P                 # 1536 == 16*16*6
assert N_FEAT == 16 * 16 * 6

CIN, CINP = 3, 4                        # conv1 in-channels padded 3->4 (sublane align)
C1, C2 = 6, 16
NB = 8                                  # samples per grid step (v7x-safe; on v5e/v6e
                                        # raise to 16/24 -- must stay a multiple of 8)


def _ceil_to(x, m):
  return ((x + m - 1) // m) * m


LANES1 = _ceil_to(H_IN * W_IN, 128)     # 2688 lanes / sample, stage-1 flat map
LANES2 = _ceil_to(H1P * W1P, 128)       # 640  lanes / sample, stage-2 flat map
LANES3 = 128                            # pooled stage-2 map, 96 padded to 128


# ---- pltpu.roll sign-convention probe (one tiny kernel, cached) ---------------------
_ROLL_IS_JNP_LIKE = None


def _probe_roll_convention():
  global _ROLL_IS_JNP_LIKE
  if _ROLL_IS_JNP_LIKE is None:
    def probe_kernel(x_ref, o_ref):
      o_ref[...] = pltpu.roll(x_ref[...], 1, axis=1)
    x = jnp.broadcast_to(jnp.arange(128, dtype=jnp.float32), (8, 128))
    r = pl.pallas_call(probe_kernel,
                       out_shape=jax.ShapeDtypeStruct((8, 128), jnp.float32))(x)
    v = float(np.asarray(r)[0, 0])
    if v == 127.0:
      _ROLL_IS_JNP_LIKE = True          # new[i] = old[i - shift]  (jnp.roll semantics)
    elif v == 1.0:
      _ROLL_IS_JNP_LIKE = False         # new[i] = old[i + shift]
    else:
      raise RuntimeError(f"unexpected pltpu.roll probe value {v}")
  return _ROLL_IS_JNP_LIKE


def make_net(batch_pad, nb=NB, *, vmem_limit_bytes=48 * 1024 * 1024):
  """Whole-network fused kernel, nb samples per grid step (batch on sublanes)."""
  assert nb % 8 == 0 and batch_pad % nb == 0
  grid = (batch_pad // nb,)
  roll_jnp_like = _probe_roll_convention()   # resolved BEFORE tracing the main kernel

  def shl(x, off, size):
    """y[..., i] = x[..., (i + off) % size] (circular left shift along lanes)."""
    if off % size == 0:
      return x
    s = (size - off) % size if roll_jnp_like else off % size
    return pltpu.roll(x, s, axis=1)

  def kernel(x_ref, w1_ref, b1_ref, s1_ref, w2_ref, b2_ref, s2_ref,
             f1w_ref, f1b_ref, f2w_ref, f2b_ref, o_ref):
    # ---------- stage 1: conv1 + bias + ReLU + 2x2/2 max-pool ----------------------
    xv = x_ref[...]                                            # (nb*4, LANES1) bf16
    taps = [shl(xv, kh * W_IN + kw, LANES1)
            for kh in range(KH) for kw in range(KW)]
    patch = jnp.concatenate(taps, axis=0)                      # (25*nb*4, LANES1) bf16
    acc = jnp.dot(w1_ref[...], patch,
                  preferred_element_type=jnp.float32)          # (nb*6, LANES1) f32
    acc = jnp.maximum(acc + b1_ref[...], 0.0)
    pw = jnp.maximum(acc, shl(acc, 1, LANES1))                 # pairwise max along w
    pd = jnp.maximum(pw, shl(pw, W_IN, LANES1))                # pairwise max along h
    p1 = jnp.dot(pd.astype(jnp.bfloat16), s1_ref[...],
                 preferred_element_type=jnp.float32)           # (nb*6, LANES2) f32

    # ---------- stage 2: conv2 + bias + ReLU + 2x2/2 max-pool ----------------------
    xv2 = p1.astype(jnp.bfloat16)
    taps2 = [shl(xv2, kh * W1P + kw, LANES2)
             for kh in range(KH) for kw in range(KW)]
    patch2 = jnp.concatenate(taps2, axis=0)                    # (25*nb*6, LANES2) bf16
    acc2 = jnp.dot(w2_ref[...], patch2,
                   preferred_element_type=jnp.float32)         # (16*nb, LANES2), rows (c,b)
    acc2 = jnp.maximum(acc2 + b2_ref[...], 0.0)
    pw2 = jnp.maximum(acc2, shl(acc2, 1, LANES2))
    pd2 = jnp.maximum(pw2, shl(pw2, W1P, LANES2))
    p2 = jnp.dot(pd2.astype(jnp.bfloat16), s2_ref[...],
                 preferred_element_type=jnp.float32)           # (16*nb, 128), rows (c,b)

    # ---------- flatten (== PyTorch view(-1,1536), folded into weight packing) ------
    # conv2's output rows are already channel-major, so the flatten is 16 aligned
    # 8-row slices concatenated along lanes; fc1's weight was reordered to match.
    feat = jnp.concatenate([p2[c * nb:(c + 1) * nb, :] for c in range(C2)],
                           axis=1)                             # (nb, 16*128) f32

    # ---------- fc1 + ReLU + fc2 (lane-padded to 128) --------------------------------
    h = jnp.dot(feat.astype(jnp.bfloat16), f1w_ref[...],
                preferred_element_type=jnp.float32) + f1b_ref[...]
    h = jnp.maximum(h, 0.0)                                    # (nb, 128)
    out = jnp.dot(h.astype(jnp.bfloat16), f2w_ref[...],
                  preferred_element_type=jnp.float32) + f2b_ref[...]
    o_ref[...] = out                                           # (nb, 128), logits in :10

  const = lambda g: (0, 0)
  # NOTE: the resident weight blocks still get Pallas' default double buffering
  # (~9 MB total); total footprint stays well under the 48 MiB limit so we skip
  # pl.Buffered(1) for portability.
  return pl.pallas_call(
      kernel,
      out_shape=jax.ShapeDtypeStruct((batch_pad, 128), jnp.float32),
      grid=grid,
      in_specs=[
          pl.BlockSpec((nb * CINP, LANES1), lambda g: (g, 0)),      # x (bf16)
          pl.BlockSpec((nb * C1, KH * KW * nb * CINP), const),      # conv1 block weight
          pl.BlockSpec((nb * C1, 1), const),                        # conv1 bias
          pl.BlockSpec((LANES1, LANES2), const),                    # pool-1 selector
          pl.BlockSpec((C2 * nb, KH * KW * nb * C1), const),        # conv2 block weight
          pl.BlockSpec((C2 * nb, 1), const),                        # conv2 bias
          pl.BlockSpec((LANES2, LANES3), const),                    # pool-2 selector
          pl.BlockSpec((C2 * LANES3, 128), const),                  # fc1 weight (padded)
          pl.BlockSpec((1, 128), const),                            # fc1 bias (padded)
          pl.BlockSpec((128, 128), const),                          # fc2 weight (padded)
          pl.BlockSpec((1, 128), const),                            # fc2 bias (padded)
      ],
      out_specs=pl.BlockSpec((nb, 128), lambda g: (g, 0)),
      compiler_params=pltpu.CompilerParams(
          dimension_semantics=("parallel",),       # batch-tile axis -> both TCs on v7x
          vmem_limit_bytes=vmem_limit_bytes,       # ~20 MiB live; 48 MiB leaves headroom
      ),
  )


def net_forward(x_nchw, kp, nb=NB):
  B, C, H, W = x_nchw.shape
  assert (C, H, W) == (CIN, H_IN, W_IN)
  bp = _ceil_to(B, nb)
  # Pack input: rows = (sample, padded channel) on sublanes, flat spatial on lanes,
  # zero-padded to LANES1; cast to bf16 to halve the HBM->VMEM DMA.
  xb = jnp.zeros((bp, CINP, LANES1), jnp.float32)
  xb = xb.at[:B, :CIN, :H * W].set(x_nchw.reshape(B, CIN, H * W))
  xb = xb.reshape(bp * CINP, LANES1).astype(jnp.bfloat16)
  net = make_net(bp, nb)
  out = net(xb, kp["w1"], kp["b1"], kp["s1"], kp["w2"], kp["b2"], kp["s2"],
            kp["f1w"], kp["f1b"], kp["f2w"], kp["f2b"])
  return out[:B, :10]


def init_params(key):
  ks = jax.random.split(key, 8)

  def u(k, shape, fan_in):
    bound = 1.0 / float(np.sqrt(fan_in))
    return jax.random.uniform(k, shape, jnp.float32, -bound, bound)

  return dict(
      c1w=u(ks[0], (6, 3, 5, 5), 3 * 25), c1b=u(ks[1], (6,), 3 * 25),
      c2w=u(ks[2], (16, 6, 5, 5), 6 * 25), c2b=u(ks[3], (16,), 6 * 25),
      f1w=u(ks[4], (100, N_FEAT), N_FEAT), f1b=u(ks[5], (100,), N_FEAT),
      f2w=u(ks[6], (10, 100), 100), f2b=u(ks[7], (10,), 100),
  )


def kernel_params(p, nb=NB):
  """Offline packing of all weights into the kernel's block/lane-padded layouts."""
  w1 = np.asarray(p["c1w"], np.float32)              # (6, 3, 5, 5)
  w2 = np.asarray(p["c2w"], np.float32)              # (16, 6, 5, 5)
  b1 = np.asarray(p["c1b"], np.float32)
  b2 = np.asarray(p["c2b"], np.float32)
  f1w = np.asarray(p["f1w"], np.float32)              # (100, 1536)
  f1b = np.asarray(p["f1b"], np.float32)
  f2w = np.asarray(p["f2w"], np.float32)               # (10, 100)
  f2b = np.asarray(p["f2b"], np.float32)

  # conv1 block weight: rows (b, co), cols (tap, b', padded ci); zero unless b' == b.
  w1t = w1.reshape(C1, CIN, KH * KW).transpose(0, 2, 1)          # (co, tap, ci)
  w1blk = np.zeros((nb, C1, KH * KW, nb, CINP), np.float32)
  for b in range(nb):
    w1blk[b, :, :, b, :CIN] = w1t
  w1blk = w1blk.reshape(nb * C1, KH * KW * nb * CINP)

  # conv2 block weight with output rows permuted to (co, b) so the PyTorch flatten
  # order falls out of aligned sublane slices in the kernel.
  w2t = w2.reshape(C2, C1, KH * KW).transpose(0, 2, 1)           # (co, tap, ci)
  w2blk = np.zeros((C2, nb, KH * KW, nb, C1), np.float32)
  for b in range(nb):
    w2blk[:, b, :, b, :] = w2t
  w2blk = w2blk.reshape(C2 * nb, KH * KW * nb * C1)

  b1blk = np.tile(b1, nb).reshape(nb * C1, 1)                    # rows (b, co)
  b2blk = np.repeat(b2, nb).reshape(C2 * nb, 1)                  # rows (co, b)

  # 2x2/2 max-pool "gather": one dense 0/1 selection matmul per stage.
  sel1 = np.zeros((LANES1, LANES2), np.float32)
  for i in range(H1P):
    for j in range(W1P):
      sel1[2 * i * W_IN + 2 * j, i * W1P + j] = 1.0
  sel2 = np.zeros((LANES2, LANES3), np.float32)
  for i in range(H2P):
    for j in range(W2P):
      sel2[2 * i * W1P + 2 * j, i * W2P + j] = 1.0

  # fc1: K reordered to (channel, lane-padded pooled map); outputs padded 100 -> 128.
  f1wp = np.zeros((C2, LANES3, 128), np.float32)
  f1wp[:, :H2P * W2P, :100] = f1w.reshape(100, C2, H2P * W2P).transpose(1, 2, 0)
  f1wp = f1wp.reshape(C2 * LANES3, 128)
  f1bp = np.zeros((1, 128), np.float32); f1bp[0, :100] = f1b
  f2wp = np.zeros((128, 128), np.float32); f2wp[:100, :10] = f2w.T
  f2bp = np.zeros((1, 128), np.float32); f2bp[0, :10] = f2b

  bf = jnp.bfloat16
  return dict(
      w1=jnp.asarray(w1blk, bf), b1=jnp.asarray(b1blk, jnp.float32),
      s1=jnp.asarray(sel1, bf),
      w2=jnp.asarray(w2blk, bf), b2=jnp.asarray(b2blk, jnp.float32),
      s2=jnp.asarray(sel2, bf),
      f1w=jnp.asarray(f1wp, bf), f1b=jnp.asarray(f1bp, jnp.float32),
      f2w=jnp.asarray(f2wp, bf), f2b=jnp.asarray(f2bp, jnp.float32),
  )


def reference_forward(x, p):
  dn = ("NCHW", "OIHW", "NCHW")

  def conv(t, w, b):
    y = jax.lax.conv_general_dilated(t, w, (1, 1), "VALID", dimension_numbers=dn,
                                     precision=jax.lax.Precision.HIGHEST)
    return y + b[None, :, None, None]

  def pool(t):
    B, C, H, W = t.shape
    return t.reshape(B, C, H // 2, 2, W // 2, 2).max(axis=(3, 5))

  h = pool(jax.nn.relu(conv(x, p["c1w"], p["c1b"])))
  h = pool(jax.nn.relu(conv(h, p["c2w"], p["c2b"])))
  h = h.reshape(-1, N_FEAT)
  h = jax.nn.relu(jnp.matmul(h, p["f1w"].T, precision=jax.lax.Precision.HIGHEST)
                  + p["f1b"])
  return jnp.matmul(h, p["f2w"].T, precision=jax.lax.Precision.HIGHEST) + p["f2b"]


if __name__ == "__main__":
  key = jax.random.PRNGKey(0)
  kx, kparams_key = jax.random.split(key)
  # 60x44 input (forced by fc1's 1536-wide flatten); batch 16 -> grid of 2 tiles of 8.
  x = jax.random.normal(kx, (16, 3, H_IN, W_IN), dtype=jnp.float32)
  params = init_params(kparams_key)
  kp = kernel_params(params, NB)

  out = jax.block_until_ready(net_forward(x, kp, NB))
  ref = jax.block_until_ready(reference_forward(x, params))

  assert out.shape == (16, 10), out.shape
  out_np, ref_np = np.asarray(out), np.asarray(ref)
  if not np.allclose(out_np, ref_np, rtol=5e-2, atol=5e-2):
    raise AssertionError(
        f"mismatch vs reference, max abs diff = {np.max(np.abs(out_np - ref_np))}")
  print("KERNEL_OK")
</pallas_src>

<mosaic_0001>
module attributes {stable_mosaic.version = 11 : i64} {
  func.func @probe_kernel(%arg0: memref<8x128xf32, #tpu.memory_space<vmem>>, %arg1: memref<8x128xf32, #tpu.memory_space<vmem>>) attributes {dimension_semantics = [], scalar_prefetch = 0 : i64, scratch_operands = 0 : i64, tpu.core_type = #tpu.core_type<tc>} {
    %c0 = arith.constant 0 : index
    %c0_0 = arith.constant 0 : index
    %0 = vector.load %arg0[%c0, %c0_0] : memref<8x128xf32, #tpu.memory_space<vmem>>, vector<8x128xf32>
    %c1_i32 = arith.constant 1 : i32
    %1 = tpu.dynamic_rotate %0 by %c1_i32 dim 1 : vector<8x128xf32>, i32 -> vector<8x128xf32>
    %c0_1 = arith.constant 0 : index
    %c0_2 = arith.constant 0 : index
    %2 = vector.load %arg1[%c0_1, %c0_2] : memref<8x128xf32, #tpu.memory_space<vmem>>, vector<8x128xf32>
    tpu.vector_store %arg1[%c0_1, %c0_2], %1 {strides = array<i32>} : memref<8x128xf32, #tpu.memory_space<vmem>>, vector<8x128xf32>,
    return
  }
}

</mosaic_0001>

<llo_original>
// kernel: tpu_custom_call.1
$region0: #{tpu_custom_call.1}
  #allocation0 [shape = 'u32[]', space=smem, size = 0x4, offset = 0x4, fixed_abs, tag = 'smem constant byte address 0x4 - core index']
  #allocation1 [shape = 'u32[144,128]{1,0:T(1,128)}', space=vmem, size = 0x12000, scoped, tag = 'internal scratch']
  %s0 = inlined_call_operand.hbm [shape: f32[8,128], index: 0, kind: input, shape index: {}]
  %s1 = inlined_call_operand.hbm [shape: f32[8,128], index: 1, kind: output, shape index: {}]
  %s2 = sld [smem:[#allocation0]]
  $region18: #{tpu_custom_call.1} parent=0
    _
  %s4 = ssub.s32 1, %s2
  %s5 = scalar_select 0, %s4, %s2
  $region1: #{tpu_custom_call.1} parent=0
    #allocation2 [shape = 'u8[4096]{0}', space=vmem, size = 0x1000, scoped, tag = 'input window, operand 0, single buffered']
    #allocation3 [shape = 's32[1]{0}', space=sflag, size = 0x4, scoped, tag = 'scoped memory for tpu_custom_call.1']
    #allocation4 [shape = 's32[1]{0}', space=sflag, size = 0x4, scoped, tag = 'scoped memory for tpu_custom_call.1']
    #allocation5 [shape = 'u8[4096]{0}', space=vmem, size = 0x1000, scoped, tag = 'output window, operand 0, single buffered']
    %6 = vsyncpa [#allocation3], 0
    %7 = vsyncpa [#allocation4], 0
    // Predicated region
    $region2: #{tpu_custom_call.1} parent=1 // pred_check
      _
    $region3: #{tpu_custom_call.1} parent=1 // pred_check_branch
      %9 = sbr.rel (0) target = $region5
    $region4: #{tpu_custom_call.1} parent=1 // pred_region
      %s11 = ssub.s32 128, 128
      %12 = vsyncadd [#allocation3], %s11
      %s14 = sshll.u32 [#allocation2], 4
      %s15 = int_to_ptr.vmem [resolvable:$true] %s14
      %17 = dma.hbm_to_vmem [thread:$0]  %s0, 128, %s15, [#allocation3]
    $region5: #{tpu_custom_call.1} parent=1 // pred_fallthru
      _
    // Predicated region
    $region6: #{tpu_custom_call.1} parent=1 // pred_check
      _
    $region7: #{tpu_custom_call.1} parent=1 // pred_check_branch
      %19 = sbr.rel (0) target = $region9
    $region8: #{tpu_custom_call.1} parent=1 // pred_region
      %20 = dma.done [#allocation3], 128
    $region9: #{tpu_custom_call.1} parent=1 // pred_fallthru
      _
    %v21 = vld [vmem:[#allocation2] sm:$0xff]
    %22 = vrot.lane.b32.xlu0 %v21, 1
    %v23 = vpop.permute.xlu0 %22
    %24 = vst [vmem:[#allocation5] sm:$0xff] %v23
    // Predicated region
    $region10: #{tpu_custom_call.1} parent=1 // pred_check
      _
    $region11: #{tpu_custom_call.1} parent=1 // pred_check_branch
      %26 = sbr.rel (0) target = $region13
    $region12: #{tpu_custom_call.1} parent=1 // pred_region
      %s28 = ssub.s32 128, 128
      %29 = vsyncadd [#allocation4], %s28
      %s31 = sshll.u32 [#allocation5], 4
      %s32 = int_to_ptr.vmem [resolvable:$true] %s31
      %34 = dma.vmem_to_hbm [thread:$0]  %s32, 128, %s1, [#allocation4]
    $region13: #{tpu_custom_call.1} parent=1 // pred_fallthru
      _
    // Predicated region
    $region14: #{tpu_custom_call.1} parent=1 // pred_check
      _
    $region15: #{tpu_custom_call.1} parent=1 // pred_check_branch
      %36 = sbr.rel (0) target = $region17
    $region16: #{tpu_custom_call.1} parent=1 // pred_region
      %37 = dma.done [#allocation4], 128
    $region17: #{tpu_custom_call.1} parent=1 // pred_fallthru
      _
    %38 = vsyncpa [#allocation3], 1
    %39 = vsyncpa [#allocation4], 1

</llo_original>
